<compile_context>
chip_gen: v6e
topology: v6e:2x2x1
jax: 0.10.0
libtpu: 0.0.40
codegen_flags: <defaults>
</compile_context>

<pallas_src>
import functools

import numpy as np
import jax
import jax.numpy as jnp
from jax import lax
from jax.experimental import pallas as pl
from jax.experimental.pallas import tpu as pltpu


# --------------------------------------------------------------------------
# Kernel
# --------------------------------------------------------------------------
def _sss_kernel(ft_ref, fp_ref, cs_ref, out_ref, *, n_freq, f_pad, eps):
    """Per-batch-element spectral-loss partial sums.

    ft_ref / fp_ref : (1, n_frames, n_fft)   frames of x_true / x_pred
    cs_ref          : (2*f_pad, n_fft)       rows [0:n_freq) = windowed cos,
                                             rows [f_pad:f_pad+n_freq) = sin,
                                             remaining rows are zero padding.
    out_ref         : (1, 1, 128)            lanes 0/1/2 = sum((St-Sp)^2),
                                             sum((St+Sp)^2), sum(|log St/Sp|)
    """
    ft = ft_ref[0]          # (n_frames, n_fft)
    fp = fp_ref[0]
    cs = cs_ref[...]        # (2*f_pad, n_fft)

    # Contract the n_fft axis of both operands: result (2*f_pad, n_frames)
    # -> n_frames is the lane axis (lane-dense elementwise/reduce phase).
    dn = (((1,), (1,)), ((), ()))
    r_t = lax.dot_general(cs, ft, dn, preferred_element_type=jnp.float32)
    r_p = lax.dot_general(cs, fp, dn, preferred_element_type=jnp.float32)

    # f_pad is a multiple of 8 -> both sublane slices are tile-aligned.
    re_t, im_t = r_t[:f_pad], r_t[f_pad:]
    re_p, im_p = r_p[:f_pad], r_p[f_pad:]

    s_t = jnp.sqrt(re_t * re_t + im_t * im_t) + eps   # (f_pad, n_frames)
    s_p = jnp.sqrt(re_p * re_p + im_p * im_p) + eps

    # Mask the zero-padded frequency rows (they hold S == eps for both).
    valid = lax.broadcasted_iota(jnp.int32, s_t.shape, 0) < n_freq

    d = jnp.where(valid, s_t - s_p, 0.0)
    a = jnp.where(valid, s_t + s_p, 0.0)
    # One log per element; approx reciprocal runs on the EUP slot (near free).
    labs = jnp.where(valid,
                     jnp.abs(jnp.log(s_t * pl.reciprocal(s_p, approx=True))),
                     0.0)

    dsum = jnp.sum(d * d)
    asum = jnp.sum(a * a)
    lsum = jnp.sum(labs)

    # Single lane-dense (last dim = 128) output write: lanes 0..2 carry the
    # three partial sums, the rest are zero.
    lane = lax.broadcasted_iota(jnp.int32, out_ref.shape, 2)
    out_ref[...] = jnp.where(lane == 0, dsum,
                   jnp.where(lane == 1, asum,
                   jnp.where(lane == 2, lsum, 0.0)))


# --------------------------------------------------------------------------
# Host-side helpers
# --------------------------------------------------------------------------
def _dft_basis_stacked(n_fft, f_pad):
    """Hann-windowed, window-normalized DFT basis, cos|sin stacked on rows.

    Shape (2*f_pad, n_fft); rows [0:n_freq) cos, [f_pad:f_pad+n_freq) sin.
    """
    n_freq = n_fft // 2 + 1
    t = np.arange(n_fft, dtype=np.float64)
    k = np.arange(n_freq, dtype=np.float64)
    # periodic hann window (torch.hann_window default)
    w = 0.5 - 0.5 * np.cos(2.0 * np.pi * t / n_fft)
    norm = np.sqrt(np.sum(w * w))            # torchaudio normalized=True
    ang = 2.0 * np.pi * np.outer(k, t) / n_fft       # (n_freq, n_fft)
    cs = np.zeros((2 * f_pad, n_fft), dtype=np.float32)
    cs[:n_freq] = np.cos(ang) * w[None, :] / norm
    cs[f_pad:f_pad + n_freq] = np.sin(ang) * w[None, :] / norm
    return cs


def _frame(x, n_fft, hop):
    """(B, L) -> (B, n_frames, n_fft), center=False framing.

    For hop == n_fft (overlap == 0, the RSSLoss default) this is a pure
    reshape — no gather copy is materialized in HBM.
    """
    B, L = x.shape
    n_frames = (L - n_fft) // hop + 1
    if hop == n_fft:
        frames = x[:, : n_frames * n_fft].reshape(B, n_frames, n_fft)
    else:
        # TODO(synk): for overlap > 0, frame in-kernel with pl.ds strided reads
        # instead of this HBM gather copy.
        idx = np.arange(n_frames)[:, None] * hop + np.arange(n_fft)[None, :]
        frames = x[:, idx]
    return frames, n_frames


# --------------------------------------------------------------------------
# Single-scale spectral loss (pallas_call wrapper)
# --------------------------------------------------------------------------
def _sss_loss_impl(x_true, x_pred, *, n_fft, alpha, overlap, eps, bf16_matmul):
    hop = int(n_fft * (1 - overlap))
    B, _ = x_true.shape
    n_freq = n_fft // 2 + 1
    f_pad = (n_freq + 7) // 8 * 8            # align the cos/sin sublane slices

    frames_t, n_frames = _frame(x_true, n_fft, hop)
    frames_p, _ = _frame(x_pred, n_fft, hop)
    cs = _dft_basis_stacked(n_fft, f_pad)

    mm_dtype = jnp.bfloat16 if bf16_matmul else jnp.float32
    frames_t = frames_t.astype(mm_dtype)
    frames_p = frames_p.astype(mm_dtype)
    cs = jnp.asarray(cs, dtype=mm_dtype)

    # VMEM budget (double-buffered inputs + output).  For very large n_fft the
    # basis would need an "arbitrary" grid axis over n_freq (esp. v7x 64 MiB);
    # here we only raise the scoped limit when the estimate gets large.
    isz = jnp.dtype(mm_dtype).itemsize
    est_vmem = 2 * (2 * n_frames * n_fft * isz + 2 * f_pad * n_fft * isz) + 2 * 128 * 4
    vmem_limit = None
    if est_vmem > 24 * 1024 * 1024:
        # TODO(synk): tile the basis over n_freq instead of raising the limit
        # once n_fft is in the thousands (v7x physical VMEM is 64 MiB).
        vmem_limit = int(min(2 * est_vmem, 100 * 1024 * 1024))

    grid_spec = pltpu.PrefetchScalarGridSpec(
        num_scalar_prefetch=0,
        grid=(B,),
        in_specs=[
            pl.BlockSpec((1, n_frames, n_fft), lambda b: (b, 0, 0)),
            pl.BlockSpec((1, n_frames, n_fft), lambda b: (b, 0, 0)),
            pl.BlockSpec((2 * f_pad, n_fft), lambda b: (0, 0)),
        ],
        out_specs=pl.BlockSpec((1, 1, 128), lambda b: (b, 0, 0)),
    )

    res = pl.pallas_call(
        functools.partial(_sss_kernel, n_freq=n_freq, f_pad=f_pad, eps=eps),
        out_shape=jax.ShapeDtypeStruct((B, 1, 128), jnp.float32),
        grid_spec=grid_spec,
        compiler_params=pltpu.CompilerParams(
            dimension_semantics=("parallel",),   # B-axis feeds both v7x TCs
            vmem_limit_bytes=vmem_limit,
        ),
    )(frames_t, frames_p, cs)

    sums = res[:, 0, :]                      # (B, 128)
    diff_sq = sums[:, 0]
    sum_sq = sums[:, 1]
    log_abs = sums[:, 2]

    # converge_term: mean over batch of per-sample Frobenius-norm ratios
    # (matches torch.linalg.norm(..., dim=(1, 2)) in the reference).
    converge_term = jnp.mean(jnp.sqrt(diff_sq) / jnp.sqrt(sum_sq))
    # log_term: L1 loss, mean over all spectrogram elements.
    log_term = jnp.sum(log_abs) / float(B * n_freq * n_frames)
    return converge_term + alpha * log_term


# One compiled executable per distinct (n_fft, shapes) — jit cache does the
# per-n_fft caching that torch's lossdict did.
sss_loss = jax.jit(
    _sss_loss_impl,
    static_argnames=("n_fft", "alpha", "overlap", "eps", "bf16_matmul"),
)


# --------------------------------------------------------------------------
# RSSLoss
# --------------------------------------------------------------------------
class RSSLoss:
    """Random-scale Spectral Loss (JAX / Pallas).

    n_fft values are drawn uniformly from [fft_min, fft_max) with a HOST
    numpy RNG (no device->host sync), and every distinct n_fft compiles its
    Pallas kernel at most once (jit cache), exactly mirroring the torch
    module's precomputed per-n_fft lossdict.
    """

    def __init__(self, fft_min, fft_max, n_scale, alpha=1.0, overlap=0,
                 eps=1e-07, seed=0, bf16_matmul=True):
        self.fft_min = int(fft_min)
        self.fft_max = int(fft_max)
        self.n_scale = int(n_scale)
        self.alpha = float(alpha)
        self.overlap = overlap
        self.eps = float(eps)
        self.bf16_matmul = bool(bf16_matmul)
        self._rng = np.random.default_rng(seed)

    def __call__(self, x_pred, x_true):
        n_ffts = self._rng.integers(self.fft_min, self.fft_max,
                                    size=self.n_scale)
        value = 0.0
        for n_fft in n_ffts:
            value = value + sss_loss(
                x_true, x_pred,
                n_fft=int(n_fft), alpha=self.alpha, overlap=self.overlap,
                eps=self.eps, bf16_matmul=self.bf16_matmul)
        return value / self.n_scale


# --------------------------------------------------------------------------
# Demo
# --------------------------------------------------------------------------
if __name__ == "__main__":
    key = jax.random.PRNGKey(0)
    k_true, k_pred = jax.random.split(key)

    B, L = 2, 256
    x_true = jax.random.normal(k_true, (B, L), dtype=jnp.float32)
    x_pred = jax.random.normal(k_pred, (B, L), dtype=jnp.float32)

    loss_fn = RSSLoss(fft_min=16, fft_max=32, n_scale=3, seed=0)
    loss = jax.block_until_ready(loss_fn(x_pred, x_true))
    assert jnp.isfinite(loss), "loss is not finite"
    print("KERNEL_OK")
</pallas_src>

<mosaic_0001>
module attributes {stable_mosaic.version = 11 : i64} {
  func.func @_sss_kernel(%arg0: i32, %arg1: memref<1x8x29xbf16, #tpu.memory_space<vmem>>, %arg2: memref<1x8x29xbf16, #tpu.memory_space<vmem>>, %arg3: memref<32x29xbf16, #tpu.memory_space<vmem>>, %arg4: memref<1x1x128xf32, #tpu.memory_space<vmem>>) attributes {dimension_semantics = [#tpu.dimension_semantics<parallel>], iteration_bounds = array<i64: 2>, scalar_prefetch = 0 : i64, scratch_operands = 0 : i64, tpu.core_type = #tpu.core_type<tc>, window_params = [{transform_indices = @transform_0, window_bounds = array<i64: 1, 8, 29>}, {transform_indices = @transform_1, window_bounds = array<i64: 1, 8, 29>}, {pipeline_mode = #tpu.pipeline_mode<synchronous>, transform_indices = @transform_2, window_bounds = array<i64: 32, 29>}, {transform_indices = @transform_3, window_bounds = array<i64: 1, 1, 128>}]} {
    %c0 = arith.constant 0 : index
    %c0_0 = arith.constant 0 : index
    %c0_1 = arith.constant 0 : index
    %0 = vector.load %arg1[%c0, %c0_0, %c0_1] : memref<1x8x29xbf16, #tpu.memory_space<vmem>>, vector<1x8x29xbf16>
    %1 = vector.shape_cast %0 : vector<1x8x29xbf16> to vector<8x29xbf16>
    %c0_2 = arith.constant 0 : index
    %c0_3 = arith.constant 0 : index
    %c0_4 = arith.constant 0 : index
    %2 = vector.load %arg2[%c0_2, %c0_3, %c0_4] : memref<1x8x29xbf16, #tpu.memory_space<vmem>>, vector<1x8x29xbf16>
    %3 = vector.shape_cast %2 : vector<1x8x29xbf16> to vector<8x29xbf16>
    %c0_5 = arith.constant 0 : index
    %c0_6 = arith.constant 0 : index
    %4 = vector.load %arg3[%c0_5, %c0_6] : memref<32x29xbf16, #tpu.memory_space<vmem>>, vector<32x29xbf16>
    %cst = arith.constant dense<0.000000e+00> : vector<32x8xf32>
    %5 = tpu.matmul %4, %1, %cst {dimension_numbers = #tpu.dot_dimension_numbers<[1], [1], [0], [0], [0, 0, 1, 0], [], []>} : vector<32x29xbf16>, vector<8x29xbf16>, vector<32x8xf32> -> vector<32x8xf32>
    %cst_7 = arith.constant dense<0.000000e+00> : vector<32x8xf32>
    %6 = tpu.matmul %4, %3, %cst_7 {dimension_numbers = #tpu.dot_dimension_numbers<[1], [1], [0], [0], [0, 0, 1, 0], [], []>} : vector<32x29xbf16>, vector<8x29xbf16>, vector<32x8xf32> -> vector<32x8xf32>
    %7 = vector.extract_strided_slice %5 {offsets = [0, 0], sizes = [16, 8], strides = [1, 1]} : vector<32x8xf32> to vector<16x8xf32>
    %8 = vector.extract_strided_slice %5 {offsets = [16, 0], sizes = [16, 8], strides = [1, 1]} : vector<32x8xf32> to vector<16x8xf32>
    %9 = vector.extract_strided_slice %6 {offsets = [0, 0], sizes = [16, 8], strides = [1, 1]} : vector<32x8xf32> to vector<16x8xf32>
    %10 = vector.extract_strided_slice %6 {offsets = [16, 0], sizes = [16, 8], strides = [1, 1]} : vector<32x8xf32> to vector<16x8xf32>
    %11 = arith.mulf %7, %7 : vector<16x8xf32>
    %12 = arith.mulf %8, %8 : vector<16x8xf32>
    %13 = arith.addf %11, %12 : vector<16x8xf32>
    %14 = math.sqrt %13 : vector<16x8xf32>
    %cst_8 = arith.constant 1.000000e-07 : f32
    %15 = vector.broadcast %cst_8 : f32 to vector<16x8xf32>
    %16 = arith.addf %14, %15 : vector<16x8xf32>
    %17 = arith.mulf %9, %9 : vector<16x8xf32>
    %18 = arith.mulf %10, %10 : vector<16x8xf32>
    %19 = arith.addf %17, %18 : vector<16x8xf32>
    %20 = math.sqrt %19 : vector<16x8xf32>
    %cst_9 = arith.constant 1.000000e-07 : f32
    %21 = vector.broadcast %cst_9 : f32 to vector<16x8xf32>
    %22 = arith.addf %20, %21 : vector<16x8xf32>
    %23 = tpu.iota {dimensions = array<i32: 0>} : vector<16x8xi32>
    %c15_i32 = arith.constant 15 : i32
    %24 = vector.broadcast %c15_i32 : i32 to vector<16x8xi32>
    %25 = arith.cmpi slt, %23, %24 : vector<16x8xi32>
    %26 = arith.subf %16, %22 : vector<16x8xf32>
    %cst_10 = arith.constant 0.000000e+00 : f32
    %27 = vector.broadcast %cst_10 : f32 to vector<16x8xf32>
    %28 = arith.select %25, %26, %27 : vector<16x8xi1>, vector<16x8xf32>
    %29 = arith.addf %16, %22 : vector<16x8xf32>
    %cst_11 = arith.constant 0.000000e+00 : f32
    %30 = vector.broadcast %cst_11 : f32 to vector<16x8xf32>
    %31 = arith.select %25, %29, %30 : vector<16x8xi1>, vector<16x8xf32>
    %32 = tpu.reciprocal %22 {approx = true} : vector<16x8xf32> -> vector<16x8xf32>
    %33 = arith.mulf %16, %32 : vector<16x8xf32>
    %34 = math.log %33 : vector<16x8xf32>
    %35 = math.absf %34 : vector<16x8xf32>
    %cst_12 = arith.constant 0.000000e+00 : f32
    %36 = vector.broadcast %cst_12 : f32 to vector<16x8xf32>
    %37 = arith.select %25, %35, %36 : vector<16x8xi1>, vector<16x8xf32>
    %38 = arith.mulf %28, %28 : vector<16x8xf32>
    %39 = vector.shape_cast %38 : vector<16x8xf32> to vector<1x16x8xf32>
    %cst_13 = arith.constant dense<0.000000e+00> : vector<1xf32>
    %40 = vector.multi_reduction <add>, %39, %cst_13 [1, 2] : vector<1x16x8xf32> to vector<1xf32>
    %41 = vector.shape_cast %40 : vector<1xf32> to vector<1x1x1xf32>
    %42 = vector.extract %41[0, 0, 0] : f32 from vector<1x1x1xf32>
    %43 = arith.mulf %31, %31 : vector<16x8xf32>
    %44 = vector.shape_cast %43 : vector<16x8xf32> to vector<1x16x8xf32>
    %cst_14 = arith.constant dense<0.000000e+00> : vector<1xf32>
    %45 = vector.multi_reduction <add>, %44, %cst_14 [1, 2] : vector<1x16x8xf32> to vector<1xf32>
    %46 = vector.shape_cast %45 : vector<1xf32> to vector<1x1x1xf32>
    %47 = vector.extract %46[0, 0, 0] : f32 from vector<1x1x1xf32>
    %48 = vector.shape_cast %37 : vector<16x8xf32> to vector<1x16x8xf32>
    %cst_15 = arith.constant dense<0.000000e+00> : vector<1xf32>
    %49 = vector.multi_reduction <add>, %48, %cst_15 [1, 2] : vector<1x16x8xf32> to vector<1xf32>
    %50 = vector.shape_cast %49 : vector<1xf32> to vector<1x1x1xf32>
    %51 = vector.extract %50[0, 0, 0] : f32 from vector<1x1x1xf32>
    %52 = tpu.iota {dimensions = array<i32: 2>} : vector<1x1x128xi32>
    %c0_i32 = arith.constant 0 : i32
    %53 = vector.broadcast %c0_i32 : i32 to vector<1x1x128xi32>
    %54 = arith.cmpi eq, %52, %53 : vector<1x1x128xi32>
    %c1_i32 = arith.constant 1 : i32
    %55 = vector.broadcast %c1_i32 : i32 to vector<1x1x128xi32>
    %56 = arith.cmpi eq, %52, %55 : vector<1x1x128xi32>
    %c2_i32 = arith.constant 2 : i32
    %57 = vector.broadcast %c2_i32 : i32 to vector<1x1x128xi32>
    %58 = arith.cmpi eq, %52, %57 : vector<1x1x128xi32>
    %cst_16 = arith.constant 0.000000e+00 : f32
    %59 = vector.broadcast %51 : f32 to vector<1x1x128xf32>
    %60 = vector.broadcast %cst_16 : f32 to vector<1x1x128xf32>
    %61 = arith.select %58, %59, %60 : vector<1x1x128xi1>, vector<1x1x128xf32>
    %62 = vector.broadcast %47 : f32 to vector<1x1x128xf32>
    %63 = arith.select %56, %62, %61 : vector<1x1x128xi1>, vector<1x1x128xf32>
    %64 = vector.broadcast %42 : f32 to vector<1x1x128xf32>
    %65 = arith.select %54, %64, %63 : vector<1x1x128xi1>, vector<1x1x128xf32>
    %c0_17 = arith.constant 0 : index
    %c0_18 = arith.constant 0 : index
    %c0_19 = arith.constant 0 : index
    %66 = vector.load %arg4[%c0_17, %c0_18, %c0_19] : memref<1x1x128xf32, #tpu.memory_space<vmem>>, vector<1x1x128xf32>
    tpu.vector_store %arg4[%c0_17, %c0_18, %c0_19], %65 {strides = array<i32>} : memref<1x1x128xf32, #tpu.memory_space<vmem>>, vector<1x1x128xf32>,
    return
  }
  func.func @transform_0(%arg0: i32) -> (i32, i32, i32) {
    %c0_i32 = arith.constant 0 : i32
    %c0_i32_0 = arith.constant 0 : i32
    %c0_i32_1 = arith.constant 0 : i32
    return %arg0, %c0_i32, %c0_i32_0 : i32, i32, i32
  }
  func.func @transform_1(%arg0: i32) -> (i32, i32, i32) {
    %c0_i32 = arith.constant 0 : i32
    %c0_i32_0 = arith.constant 0 : i32
    %c0_i32_1 = arith.constant 0 : i32
    return %arg0, %c0_i32, %c0_i32_0 : i32, i32, i32
  }
  func.func @transform_2(%arg0: i32) -> (i32, i32) {
    %c0_i32 = arith.constant 0 : i32
    %c0_i32_0 = arith.constant 0 : i32
    %c0_i32_1 = arith.constant 0 : i32
    return %c0_i32, %c0_i32_0 : i32, i32
  }
  func.func @transform_3(%arg0: i32) -> (i32, i32, i32) {
    %c0_i32 = arith.constant 0 : i32
    %c0_i32_0 = arith.constant 0 : i32
    %c0_i32_1 = arith.constant 0 : i32
    return %arg0, %c0_i32, %c0_i32_0 : i32, i32, i32
  }
}

</mosaic_0001>

<llo_original>
// kernel: _sss_loss_impl.1
$region0: #{_sss_loss_impl.1}
  #allocation0 [shape = 'u32[]', space=smem, size = 0x4, offset = 0x4, fixed_abs, tag = 'smem constant byte address 0x4 - core index']
  #allocation1 [shape = 'u32[144,128]{1,0:T(1,128)}', space=vmem, size = 0x12000, scoped, tag = 'internal scratch']
  %s0 = inlined_call_operand.vmem [shape: bf16[2,8,29], index: 0, kind: input, shape index: {}]
  %s1 = inlined_call_operand.vmem [shape: bf16[2,8,29], index: 1, kind: input, shape index: {}]
  %s2 = inlined_call_operand.vmem [shape: bf16[32,29], index: 2, kind: input, shape index: {}]
  %s3 = inlined_call_operand.vmem [shape: f32[2,1,128], index: 3, kind: output, shape index: {}]
  %s4 = sld [smem:[#allocation0]]
  $region45: #{_sss_loss_impl.1} parent=0
    _
  %s6 = ssub.s32 1, %s4
  %s7 = scalar_select 0, %s6, %s4
  loop: start=0, step=1, limit=4
  $region2: #{_sss_loss_impl.1} parent=0 // loop_pre_header
    _
  $region3: #{_sss_loss_impl.1} parent=0 // loop_header
    %s9 = sphi 0, %s13
    %p10 = scmp.ge.s32.totalorder %s9, 4
    %s19 = sphi 0, %s21
    %s22 = sphi 0, %s19
    %s23 = sphi 0, %s22
    %s39 = sphi 0, %s23
    %s45 = sphi 0, %s47
    %s48 = sphi 0, %s45
    %s49 = sphi 0, %s48
    %s65 = sphi 0, %s49
    %s69 = sphi 0, %s69
    %s71 = sphi 0, %s69
    %s72 = sphi 0, %s71
    %s86 = sphi 0, %s72
    %s92 = sphi 0, %s94
    %s95 = sphi 0, %s92
    %s96 = sphi 0, %s95
    %s112 = sphi 0, %s96
  $region4: #{_sss_loss_impl.1} parent=0 // loop_header_branch
    %12 = sbr.rel (%p10) target = $region8
  $region5: #{_sss_loss_impl.1} parent=0 // loop_body
    %s14 = ssub.s32 %s9, 1
    %s15 = ssub.s32 %s9, 2
    %s16 = sadd.s32 %s9, 1
    %s17 = ssub.s32 %s9, %s16
    %p18 = scmp.eq.s32.totalorder %s17, 0
    %s20 = sadd.s32 %s19, 1
    %s21 = scalar_select %p18, %s19, %s20
    %p24 = pneg %p18
    %p25 = scmp.eq.s32.totalorder %s9, 1
    %p26 = por %p24, %p25
    %p27 = scmp.ne.s32.totalorder %s19, %s22
    %p28 = scmp.eq.s32.totalorder %s9, 0
    %p29 = por %p27, %p28
    %p30 = scmp.ne.s32.totalorder %s19, %s22
    %p31 = scmp.eq.s32.totalorder %s14, 1
    %p32 = por %p30, %p31
    %p33 = scmp.ne.s32.totalorder %s22, %s23
    %p34 = scmp.eq.s32.totalorder %s14, 0
    %p35 = por %p33, %p34
    %p36 = scmp.ne.s32.totalorder %s22, %s23
    %p37 = scmp.eq.s32.totalorder %s15, 1
    %p38 = por %p36, %p37
    %p40 = scmp.ne.s32.totalorder %s23, %s39
    %p41 = scmp.eq.s32.totalorder %s15, 0
    %p42 = por %p40, %p41
    %s43 = ssub.s32 %s9, %s16
    %p44 = scmp.eq.s32.totalorder %s43, 0
    %s46 = sadd.s32 %s45, 1
    %s47 = scalar_select %p44, %s45, %s46
    %p50 = pneg %p44
    %p51 = scmp.eq.s32.totalorder %s9, 1
    %p52 = por %p50, %p51
    %p53 = scmp.ne.s32.totalorder %s45, %s48
    %p54 = scmp.eq.s32.totalorder %s9, 0
    %p55 = por %p53, %p54
    %p56 = scmp.ne.s32.totalorder %s45, %s48
    %p57 = scmp.eq.s32.totalorder %s14, 1
    %p58 = por %p56, %p57
    %p59 = scmp.ne.s32.totalorder %s48, %s49
    %p60 = scmp.eq.s32.totalorder %s14, 0
    %p61 = por %p59, %p60
    %p62 = scmp.ne.s32.totalorder %s48, %s49
    %p63 = scmp.eq.s32.totalorder %s15, 1
    %p64 = por %p62, %p63
    %p66 = scmp.ne.s32.totalorder %s49, %s65
    %p67 = scmp.eq.s32.totalorder %s15, 0
    %p68 = por %p66, %p67
    %s70 = sadd.s32 %s69, 1
    %p73 = scmp.eq.s32.totalorder %s9, 1
    %p74 = scmp.ne.s32.totalorder %s69, %s71
    %p75 = scmp.eq.s32.totalorder %s9, 0
    %p76 = por %p74, %p75
    %p77 = scmp.ne.s32.totalorder %s69, %s71
    %p78 = scmp.eq.s32.totalorder %s14, 1
    %p79 = por %p77, %p78
    %p80 = scmp.ne.s32.totalorder %s71, %s72
    %p81 = scmp.eq.s32.totalorder %s14, 0
    %p82 = por %p80, %p81
    %p83 = scmp.ne.s32.totalorder %s71, %s72
    %p84 = scmp.eq.s32.totalorder %s15, 1
    %p85 = por %p83, %p84
    %p87 = scmp.ne.s32.totalorder %s72, %s86
    %p88 = scmp.eq.s32.totalorder %s15, 0
    %p89 = por %p87, %p88
    %s90 = ssub.s32 %s9, %s16
    %p91 = scmp.eq.s32.totalorder %s90, 0
    %s93 = sadd.s32 %s92, 1
    %s94 = scalar_select %p91, %s92, %s93
    %p97 = pneg %p91
    %p98 = scmp.eq.s32.totalorder %s9, 1
    %p99 = por %p97, %p98
    %p100 = scmp.ne.s32.totalorder %s92, %s95
    %p101 = scmp.eq.s32.totalorder %s9, 0
    %p102 = por %p100, %p101
    %p103 = scmp.ne.s32.totalorder %s92, %s95
    %p104 = scmp.eq.s32.totalorder %s14, 1
    %p105 = por %p103, %p104
    %p106 = scmp.ne.s32.totalorder %s95, %s96
    %p107 = scmp.eq.s32.totalorder %s14, 0
    %p108 = por %p106, %p107
    %p109 = scmp.ne.s32.totalorder %s95, %s96
    %p110 = scmp.eq.s32.totalorder %s15, 1
    %p111 = por %p109, %p110
    %p113 = scmp.ne.s32.totalorder %s96, %s112
    %p114 = scmp.eq.s32.totalorder %s15, 0
    %p115 = por %p113, %p114
    %p116 = scmp.le.s32.totalorder 1, %s9
    %p117 = scmp.lt.s32.totalorder %s9, 3
    %p118 = pnand %p116, %p117
    %p119 = pneg %p118
    // Predicated region
    $region9: #{_sss_loss_impl.1} parent=5 // pred_check
      _
    $region10: #{_sss_loss_impl.1} parent=5 // pred_check_branch
      %121 = sbr.rel (%p118) target = $region12
    $region11: #{_sss_loss_impl.1} parent=5 // pred_region
      %s122 = ssub.s32 %s9, 1
      // Predicated region
      $region13: #{_sss_loss_impl.1} parent=11 // pred_check
        %p123 = pneg %p82
      $region14: #{_sss_loss_impl.1} parent=11 // pred_check_branch
        %125 = sbr.rel (%p123) target = $region16
      $region15: #{_sss_loss_impl.1} parent=11 // pred_region
        _
      $region16: #{_sss_loss_impl.1} parent=11 // pred_fallthru
        _
    $region12: #{_sss_loss_impl.1} parent=5 // pred_fallthru
      _
    %p126 = scmp.lt.s32.totalorder %s9, 2
    // Predicated region
    $region17: #{_sss_loss_impl.1} parent=5 // pred_check
      %p127 = pneg %p126
    $region18: #{_sss_loss_impl.1} parent=5 // pred_check_branch
      %129 = sbr.rel (%p127) target = $region20
    $region19: #{_sss_loss_impl.1} parent=5 // pred_region
      // Predicated region
      $region21: #{_sss_loss_impl.1} parent=19 // pred_check
        %p130 = pneg %p29
      $region22: #{_sss_loss_impl.1} parent=19 // pred_check_branch
        %132 = sbr.rel (%p130) target = $region24
      $region23: #{_sss_loss_impl.1} parent=19 // pred_region
        %p133 = scmp.lt.s32.totalorder %s9, 1
        %s134 = scalar_select %p133, %s9, 1
        %s135 = smul.addr %s134, 4
        %s136 = scalar_lea.vmem %s0, %s135
      $region24: #{_sss_loss_impl.1} parent=19 // pred_fallthru
        _
      // Predicated region
      $region25: #{_sss_loss_impl.1} parent=19 // pred_check
        %p137 = pneg %p55
      $region26: #{_sss_loss_impl.1} parent=19 // pred_check_branch
        %139 = sbr.rel (%p137) target = $region28
      $region27: #{_sss_loss_impl.1} parent=19 // pred_region
        %p140 = scmp.lt.s32.totalorder %s9, 1
        %s141 = scalar_select %p140, %s9, 1
        %s142 = smul.addr %s141, 4
        %s143 = scalar_lea.vmem %s1, %s142
      $region28: #{_sss_loss_impl.1} parent=19 // pred_fallthru
        _
    $region20: #{_sss_loss_impl.1} parent=5 // pred_fallthru
      _
    %p144 = scmp.le.s32.totalorder 1, %s9
    %p145 = scmp.lt.s32.totalorder %s9, 3
    %p146 = pnand %p144, %p145
    %p147 = pneg %p146
    // Predicated region
    $region29: #{_sss_loss_impl.1} parent=5 // pred_check
      _
    $region30: #{_sss_loss_impl.1} parent=5 // pred_check_branch
      %149 = sbr.rel (%p146) target = $region32
    $region31: #{_sss_loss_impl.1} parent=5 // pred_region
      %s150 = ssub.s32 %s9, 1
      %p151 = scmp.lt.s32.totalorder %s14, 1
      %s152 = scalar_select %p151, %s14, 1
      %s153 = smul.addr %s152, 4
      %s154 = scalar_lea.vmem %s0, %s153
      %p155 = pneg %p35
      %p156 = pneg %p32
      %p157 = scmp.lt.s32.totalorder %s14, 1
      %s158 = scalar_select %p157, %s14, 1
      %s159 = smul.addr %s158, 4
      %s160 = scalar_lea.vmem %s1, %s159
      %p161 = pneg %p61
      %p162 = pneg %p58
      %p163 = pneg %p82
      %p164 = pneg %p79
      %p165 = pneg %p108
      %p166 = pneg %p105
      %p167 = scmp.lt.s32.totalorder %s14, 1
      %s168 = scalar_select %p167, %s14, 1
      %s169 = scalar_lea.vmem %s3, %s168
      %p170 = scmp.lt.s32.totalorder %s14, 1
      %s171 = scalar_select %p170, %s14, 1
      %s172 = smul.addr %s171, 4
      %s173 = scalar_lea.vmem %s0, %s172
      %p174 = scmp.lt.s32.totalorder %s14, 1
      %s175 = scalar_select %p174, %s14, 1
      %s176 = smul.addr %s175, 4
      %s177 = scalar_lea.vmem %s1, %s176
      %p178 = scmp.lt.s32.totalorder %s14, 1
      %s179 = scalar_select %p178, %s14, 1
      %s180 = scalar_lea.vmem %s3, %s179
      %v182 = vld [vmem:[%s173] sm:$0xf]
      %v183 = vld [vmem:[%s177] sm:$0xf]
      %v184 = vld [vmem:[%s2] sm:$0xf]
      %v185 = vld [vmem:[%s2 + $0x4] sm:$0xf]
      %v186 = vld [vmem:[%s2 + $0x8] sm:$0xf]
      %v187 = vld [vmem:[%s2 + $0xc] sm:$0xf]
      %v192 = vunpack.c.l.b16 %v184
      %v193 = vunpack.c.l.b16 %v185
      %v194 = vunpack.c.l.b16 %v186
      %v195 = vunpack.c.l.b16 %v187
      %v196 = vpack.c.b16 %v193, %v192
      %v197 = vpack.c.b16 %v195, %v194
      %vm198 = vcmask 236544
      %v200 = vsel %vm198, %v196, 0
      %v203 = vsel %vm198, %v197, 0
      %v206 = vsel %vm198, %v182, 0
      %208 = vmatprep.subr.bf16.mxu0 0
      %209 = vmatpush1.bf16.xpose.msra.mxu0 0
      %210 = vmatprep.subr.bf16.mxu0 0
      %211 = vmatpush1.bf16.xpose.msra.mxu0 0
      %212 = vmatprep.subr.bf16.mxu0 0
      %213 = vmatpush1.bf16.xpose.msra.mxu0 0
      %214 = vmatprep.subr.bf16.mxu0 0
      %215 = vmatpush1.bf16.xpose.msra.mxu0 0
      %216 = vmatprep.subr.bf16.mxu0 0
      %217 = vmatpush1.bf16.xpose.msra.mxu0 0
      %218 = vmatprep.subr.bf16.mxu0 0
      %219 = vmatpush1.bf16.xpose.msra.mxu0 0
      %220 = vmatprep.subr.bf16.mxu0 0
      %221 = vmatpush1.bf16.xpose.msra.mxu0 0
      %222 = vmatprep.subr.bf16.mxu0 0
      %223 = vmatpush1.bf16.xpose.msra.mxu0 %v206
      %224 = vmatprep.subr.bf16.mxu0 0
      %225 = vmatpush2.bf16.xpose.msra.mxu0 0
      %226 = vmatprep.subr.bf16.mxu0 0
      %227 = vmatpush2.bf16.xpose.msra.mxu0 0
      %228 = vmatprep.subr.bf16.mxu0 0
      %229 = vmatpush2.bf16.xpose.msra.mxu0 0
      %230 = vmatprep.subr.bf16.mxu0 0
      %231 = vmatpush2.bf16.xpose.msra.mxu0 0
      %232 = vmatprep.subr.bf16.mxu0 0
      %233 = vmatpush2.bf16.xpose.msra.mxu0 0
      %234 = vmatprep.subr.bf16.mxu0 0
      %235 = vmatpush2.bf16.xpose.msra.mxu0 0
      %236 = vmatprep.subr.bf16.mxu0 0
      %237 = vmatpush2.bf16.xpose.msra.mxu0 0
      %238 = vmatprep.subr.bf16.mxu0 0
      %239 = vmatpush2.bf16.xpose.msra.mxu0 0
      %240 = vmatprep.mubr.bf16.mxu0 0
      %241 = vmatmul.mubr.bf16.gmra.mxu0 %v200
      %v242 = vpop.f32.mrf.mxu0
      %v243 = vadd.f32 0.0, %v242
      %v244 = vpop.f32.mrf.mxu0
      %v245 = vpop.f32.mrf.mxu0
      %v246 = vadd.f32 0.0, %v245
      %v247 = vpop.f32.mrf.mxu0
      %248 = vmatprep.mubr.bf16.mxu0 0
      %249 = vmatmul.mubr.bf16.gmra.mxu0 %v203
      %v250 = vpop.f32.mrf.mxu0
      %v251 = vadd.f32 0.0, %v250
      %v252 = vpop.f32.mrf.mxu0
      %v253 = vpop.f32.mrf.mxu0
      %v254 = vadd.f32 0.0, %v253
      %v255 = vpop.f32.mrf.mxu0
      %256 = vdwg.mxu0
      %v258 = vsel %vm198, %v183, 0
      %260 = vmatprep.subr.bf16.mxu0 0
      %261 = vmatpush1.bf16.xpose.msra.mxu0 0
      %262 = vmatprep.subr.bf16.mxu0 0
      %263 = vmatpush1.bf16.xpose.msra.mxu0 0
      %264 = vmatprep.subr.bf16.mxu0 0
      %265 = vmatpush1.bf16.xpose.msra.mxu0 0
      %266 = vmatprep.subr.bf16.mxu0 0
      %267 = vmatpush1.bf16.xpose.msra.mxu0 0
      %268 = vmatprep.subr.bf16.mxu0 0
      %269 = vmatpush1.bf16.xpose.msra.mxu0 0
      %270 = vmatprep.subr.bf16.mxu0 0
      %271 = vmatpush1.bf16.xpose.msra.mxu0 0
      %272 = vmatprep.subr.bf16.mxu0 0
      %273 = vmatpush1.bf16.xpose.msra.mxu0 0
      %274 = vmatprep.subr.bf16.mxu0 0
      %275 = vmatpush1.bf16.xpose.msra.mxu0 %v258
      %276 = vmatprep.subr.bf16.mxu0 0
      %277 = vmatpush2.bf16.xpose.msra.mxu0 0
      %278 = vmatprep.subr.bf16.mxu0 0
      %279 = vmatpush2.bf16.xpose.msra.mxu0 0
      %280 = vmatprep.subr.bf16.mxu0 0
      %281 = vmatpush2.bf16.xpose.msra.mxu0 0
      %282 = vmatprep.subr.bf16.mxu0 0
      %283 = vmatpush2.bf16.xpose.msra.mxu0 0
      %284 = vmatprep.subr.bf16.mxu0 0
      %285 = vmatpush2.bf16.xpose.msra.mxu0 0
      %286 = vmatprep.subr.bf16.mxu0 0
      %287 = vmatpush2.bf16.xpose.msra.mxu0 0
      %288 = vmatprep.subr.bf16.mxu0 0
      %289 = vmatpush2.bf16.xpose.msra.mxu0 0
      %290 = vmatprep.subr.bf16.mxu0 0
      %291 = vmatpush2.bf16.xpose.msra.mxu0 0
      %292 = vmatprep.mubr.bf16.mxu0 0
      %293 = vmatmul.mubr.bf16.gmra.mxu0 %v200
      %v294 = vpop.f32.mrf.mxu0
      %v295 = vadd.f32 0.0, %v294
      %v296 = vpop.f32.mrf.mxu0
      %v297 = vpop.f32.mrf.mxu0
      %v298 = vadd.f32 0.0, %v297
      %v299 = vpop.f32.mrf.mxu0
      %300 = vmatprep.mubr.bf16.mxu0 0
      %301 = vmatmul.mubr.bf16.gmra.mxu0 %v203
      %v302 = vpop.f32.mrf.mxu0
      %v303 = vadd.f32 0.0, %v302
      %v304 = vpop.f32.mrf.mxu0
      %v305 = vpop.f32.mrf.mxu0
      %v306 = vadd.f32 0.0, %v305
      %v307 = vpop.f32.mrf.mxu0
      %308 = vdwg.mxu0
      %v309 = vmul.f32 %v243, %v243
      %v310 = vmul.f32 %v246, %v246
      %v311 = vmul.f32 %v251, %v251
      %v312 = vmul.f32 %v254, %v254
      %v313 = vadd.f32 %v309, %v311
      %v314 = vadd.f32 %v310, %v312
      %v315 = vrsqrt.pop %v313
      %v316 = vmul.f32 %v313, %v315
      %vm317 = vcmp.eq.f32.partialorder %v313, inf
      %v318 = vsel %vm317, %v313, %v316
      %vm319 = vcmp.eq.f32.partialorder %v313, 0.0
      %v320 = vand.u32 %v313, 2147483648
      %v321 = vsel %vm319, %v320, %v318
      %v322 = vrsqrt.pop %v314
      %v323 = vmul.f32 %v314, %v322
      %vm324 = vcmp.eq.f32.partialorder %v314, inf
      %v325 = vsel %vm324, %v314, %v323
      %vm326 = vcmp.eq.f32.partialorder %v314, 0.0
      %v327 = vand.u32 %v314, 2147483648
      %v328 = vsel %vm326, %v327, %v325
      %v329 = vadd.f32 %v321, 1e-07
      %v330 = vadd.f32 %v328, 1e-07
      %v331 = vmul.f32 %v295, %v295
      %v332 = vmul.f32 %v298, %v298
      %v333 = vmul.f32 %v303, %v303
      %v334 = vmul.f32 %v306, %v306
      %v335 = vadd.f32 %v331, %v333
      %v336 = vadd.f32 %v332, %v334
      %v337 = vrsqrt.pop %v335
      %v338 = vmul.f32 %v335, %v337
      %vm339 = vcmp.eq.f32.partialorder %v335, inf
      %v340 = vsel %vm339, %v335, %v338
      %vm341 = vcmp.eq.f32.partialorder %v335, 0.0
      %v342 = vand.u32 %v335, 2147483648
      %v343 = vsel %vm341, %v342, %v340
      %v344 = vrsqrt.pop %v336
      %v345 = vmul.f32 %v336, %v344
      %vm346 = vcmp.eq.f32.partialorder %v336, inf
      %v347 = vsel %vm346, %v336, %v345
      %vm348 = vcmp.eq.f32.partialorder %v336, 0.0
      %v349 = vand.u32 %v336, 2147483648
      %v350 = vsel %vm348, %v349, %v347
      %v351 = vadd.f32 %v343, 1e-07
      %v352 = vadd.f32 %v350, 1e-07
      %v353 = vlaneseq
      %v354 = vshrl.u32 %v353, 7
      %v355 = vadd.s32 %v354, 8
      %vm356 = vcmp.lt.s32.totalorder %v354, 15
      %vm357 = vcmp.lt.s32.totalorder %v355, 15
      %v358 = vsub.f32 %v329, %v351
      %v359 = vsub.f32 %v330, %v352
      %v360 = vsel %vm356, %v358, 0.0
      %v361 = vsel %vm357, %v359, 0.0
      %v362 = vadd.f32 %v329, %v351
      %v363 = vadd.f32 %v330, %v352
      %v364 = vsel %vm356, %v362, 0.0
      %v365 = vsel %vm357, %v363, 0.0
      %v366 = vrcp.pop %v351
      %v367 = vrcp.pop %v352
      %v368 = vmul.f32 %v329, %v366
      %v369 = vmul.f32 %v330, %v367
      %v370 = vlog2.pop %v368
      %v371 = vmul.f32 %v370, 0.6931472
      %v372 = vlog2.pop %v369
      %v373 = vmul.f32 %v372, 0.6931472
      %v374 = vand.u32 2147483647, %v371
      %v375 = vand.u32 2147483647, %v373
      %v376 = vsel %vm356, %v374, 0.0
      %v377 = vsel %vm357, %v375, 0.0
      %v378 = vmul.f32 %v360, %v360
      %v379 = vmul.f32 %v361, %v361
      %vm380 = vcmask 64512
      %v381 = vsel %vm380, %v378, 0.0
      %v382 = vsel %vm380, %v379, 0.0
      %v383 = vadd.f32 %v381, %v382
      %384 = vadd.xlane.f32.xlu0 %v383
      %v385 = vpop.xlane.xlu0 %384
      %v386 = vrot.slane %v385, 4
      %v387 = vadd.f32 %v385, %v386
      %v388 = vrot.slane %v387, 2
      %v389 = vadd.f32 %v387, %v388
      %v390 = vrot.slane %v389, 1
      %v391 = vadd.f32 %v389, %v390
      %s392 = vtos %v391
      %v393 = vmul.f32 %v364, %v364
      %v394 = vmul.f32 %v365, %v365
      %v395 = vsel %vm380, %v393, 0.0
      %v396 = vsel %vm380, %v394, 0.0
      %v397 = vadd.f32 %v395, %v396
      %398 = vadd.xlane.f32.xlu0 %v397
      %v399 = vpop.xlane.xlu0 %398
      %v400 = vrot.slane %v399, 4
      %v401 = vadd.f32 %v399, %v400
      %v402 = vrot.slane %v401, 2
      %v403 = vadd.f32 %v401, %v402
      %v404 = vrot.slane %v403, 1
      %v405 = vadd.f32 %v403, %v404
      %s406 = vtos %v405
      %v407 = vsel %vm380, %v376, 0.0
      %v408 = vsel %vm380, %v377, 0.0
      %v409 = vadd.f32 %v407, %v408
      %410 = vadd.xlane.f32.xlu0 %v409
      %v411 = vpop.xlane.xlu0 %410
      %v412 = vrot.slane %v411, 4
      %v413 = vadd.f32 %v411, %v412
      %v414 = vrot.slane %v413, 2
      %v415 = vadd.f32 %v413, %v414
      %v416 = vrot.slane %v415, 1
      %v417 = vadd.f32 %v415, %v416
      %s418 = vtos %v417
      %v419 = vlaneseq
      %v420 = vand.u32 %v419, 127
      %vm421 = vcmp.eq.s32.totalorder %v420, 0
      %vm422 = vcmp.eq.s32.totalorder %v420, 1
      %vm423 = vcmp.eq.s32.totalorder %v420, 2
      %v424 = vstv %s418
      %v425 = vsel %vm423, %v424, 0.0
      %v426 = vstv %s406
      %v427 = vsel %vm422, %v426, %v425
      %v428 = vstv %s392
      %v429 = vsel %vm421, %v428, %v427
      %430 = vst [vmem:[%s180] sm:$0x1] %v429
      %p431 = scmp.lt.s32.totalorder %s14, 1
      %s432 = scalar_select %p431, %s14, 1
      %s433 = scalar_lea.vmem %s3, %s432
      // Predicated region
      $region33: #{_sss_loss_impl.1} parent=31 // pred_check
        %p434 = pneg %p105
      $region34: #{_sss_loss_impl.1} parent=31 // pred_check_branch
        %436 = sbr.rel (%p434) target = $region36
      $region35: #{_sss_loss_impl.1} parent=31 // pred_region
        _
      $region36: #{_sss_loss_impl.1} parent=31 // pred_fallthru
        _
    $region32: #{_sss_loss_impl.1} parent=5 // pred_fallthru
      _
    %p437 = scmp.le.s32.totalorder 2, %s9
    // Predicated region
    $region37: #{_sss_loss_impl.1} parent=5 // pred_check
      %p438 = pneg %p437
    $region38: #{_sss_loss_impl.1} parent=5 // pred_check_branch
      %440 = sbr.rel (%p438) target = $region40
    $region39: #{_sss_loss_impl.1} parent=5 // pred_region
      %s441 = ssub.s32 %s9, 2
      // Predicated region
      $region41: #{_sss_loss_impl.1} parent=39 // pred_check
        %p442 = pneg %p111
      $region42: #{_sss_loss_impl.1} parent=39 // pred_check_branch
        %444 = sbr.rel (%p442) target = $region44
      $region43: #{_sss_loss_impl.1} parent=39 // pred_region
        %p445 = scmp.lt.s32.totalorder %s15, 1
        %s446 = scalar_select %p445, %s15, 1
        %s447 = scalar_lea.vmem %s3, %s446
      $region44: #{_sss_loss_impl.1} parent=39 // pred_fallthru
        _
    $region40: #{_sss_loss_impl.1} parent=5 // pred_fallthru
      _
  $region6: #{_sss_loss_impl.1} parent=0 // loop_footer
    %s13 = sadd.s32 1, %s9
  $region7: #{_sss_loss_impl.1} parent=0 // loop_footer_branch
    %8 = sbr.rel target = $region3
  $region8: #{_sss_loss_impl.1} parent=0 // loop_exit
    _

</llo_original>
